<compile_context>
chip_gen: v5e
topology: v5e:2x2
jax: 0.10.0
libtpu: 0.0.40
codegen_flags: <defaults>
</compile_context>

<pallas_src>
import jax
import jax.numpy as jnp
from jax import lax
from jax.experimental import pallas as pl
from jax.experimental.pallas import tpu as pltpu


# ----------------------------------------------------------------------------
# Kernel
# ----------------------------------------------------------------------------
def _make_kernel(Cin, Cout, K, dilation, padding, tile_l):
    d = dilation

    def kernel(x_ref, w1_ref, b1_ref, w2_ref, b2_ref, o_ref, xbuf, hbuf):
        # x_ref : (1, Cin, tile_l)       current (batch, time-tile) of the input, NCL
        # w1_ref: (2*Cout, K*Cin)        conv1 im2col weights; rows [Cout:2*Cout] carry
        #                                the fused 1x1 downsample on the last tap
        # b1_ref: (2*Cout, 1)            [b1 ; b_downsample]
        # w2_ref: (Cout, K*Cout)         conv2 im2col weights
        # b2_ref: (Cout, 1)
        # o_ref : (1, Cout, tile_l)
        # xbuf  : (Cin,  padding+tile_l) persistent scratch: [x halo | x tile]
        # hbuf  : (Cout, padding+tile_l) persistent scratch: [h halo | h tile]
        li = pl.program_id(1)

        # ---- causal left-pad / cross-tile halo handling ----------------------
        @pl.when(li == 0)
        def _():
            xbuf[:, :padding] = jnp.zeros((Cin, padding), jnp.float32)
            hbuf[:, :padding] = jnp.zeros((Cout, padding), jnp.float32)

        @pl.when(li != 0)
        def _():
            # last `padding` time steps of the previous tile become this tile's halo
            xbuf[:, :padding] = xbuf[:, tile_l:tile_l + padding]
            hbuf[:, :padding] = hbuf[:, tile_l:tile_l + padding]

        xbuf[:, padding:] = x_ref[0].astype(jnp.float32)

        # ---- conv1 (+ fused 1x1 downsample): one im2col MXU matmul ----------
        x_taps = jnp.concatenate(
            [xbuf[:, t * d: t * d + tile_l] for t in range(K)], axis=0)  # (K*Cin, tile_l)
        y1 = jnp.dot(w1_ref[...], x_taps,
                     preferred_element_type=jnp.float32) + b1_ref[...]   # (2*Cout, tile_l)
        h = jnp.maximum(y1[:Cout], 0.0)   # relu1 (dropout1 == identity at inference)
        res = y1[Cout:]                   # downsample(x) + bias, residual path

        # ---- conv2: one im2col MXU matmul ------------------------------------
        hbuf[:, padding:] = h
        h_taps = jnp.concatenate(
            [hbuf[:, t * d: t * d + tile_l] for t in range(K)], axis=0)  # (K*Cout, tile_l)
        y2 = jnp.dot(w2_ref[...], h_taps,
                     preferred_element_type=jnp.float32) + b2_ref[...]   # (Cout, tile_l)
        out = jnp.maximum(y2, 0.0)        # relu2 (dropout2 == identity)

        # ---- residual add + final ReLU (lane-dense store) --------------------
        o_ref[0] = jnp.maximum(out + res, 0.0).astype(o_ref.dtype)

    return kernel


def _choose_tile_l(L, padding):
    """Largest lane-aligned time tile that divides L (and covers the halo)."""
    if L % 128 == 0:
        for cand in (1024, 512, 256, 128):
            if L % cand == 0 and cand >= padding:
                return cand
    return L  # small / irregular L: single tile (block == full dim is always legal)


# ----------------------------------------------------------------------------
# Wrapper
# ----------------------------------------------------------------------------
def temporal_block_forward(x_ncl, params, *, kernel_size, dilation, padding,
                           tile_l=None):
    """x_ncl: (N, Cin, L) float32 (PyTorch Conv1d layout). Returns (N, Cout, L)."""
    N, Cin, L = x_ncl.shape
    K = kernel_size
    Cout = params["w2_mat"].shape[0]
    assert padding == (K - 1) * dilation and padding >= 1

    if tile_l is None:
        tile_l = _choose_tile_l(L, padding)
    assert L % tile_l == 0 and tile_l >= padding
    n_l = L // tile_l

    kernel = _make_kernel(Cin, Cout, K, dilation, padding, tile_l)

    flops = 2 * N * L * (K * Cin * Cout + Cin * Cout + K * Cout * Cout)
    bytes_accessed = 4 * (N * Cin * L + N * Cout * L
                          + int(params["w1_fused"].size) + int(params["w2_mat"].size)
                          + int(params["b1_fused"].size) + int(params["b2"].size))

    grid_spec = pltpu.PrefetchScalarGridSpec(
        num_scalar_prefetch=0,
        grid=(N, n_l),
        in_specs=[
            pl.BlockSpec((1, Cin, tile_l), lambda n, l: (n, 0, l)),
            pl.BlockSpec((2 * Cout, K * Cin), lambda n, l: (0, 0)),
            pl.BlockSpec((2 * Cout, 1), lambda n, l: (0, 0)),
            pl.BlockSpec((Cout, K * Cout), lambda n, l: (0, 0)),
            pl.BlockSpec((Cout, 1), lambda n, l: (0, 0)),
        ],
        out_specs=pl.BlockSpec((1, Cout, tile_l), lambda n, l: (n, 0, l)),
        scratch_shapes=[
            pltpu.VMEM((Cin, padding + tile_l), jnp.float32),
            pltpu.VMEM((Cout, padding + tile_l), jnp.float32),
        ],
    )

    return pl.pallas_call(
        kernel,
        out_shape=jax.ShapeDtypeStruct((N, Cout, L), x_ncl.dtype),
        grid_spec=grid_spec,
        compiler_params=pltpu.CompilerParams(
            dimension_semantics=("parallel", "arbitrary"),
            vmem_limit_bytes=32 * 1024 * 1024),
        cost_estimate=pl.CostEstimate(
            flops=flops, transcendentals=0, bytes_accessed=bytes_accessed),
    )(x_ncl, params["w1_fused"], params["b1_fused"],
      params["w2_mat"], params["b2"])


# ----------------------------------------------------------------------------
# Parameter construction (deterministic, synthetic; mirrors module __init__).
# ----------------------------------------------------------------------------
def make_params(key, n_inputs, n_outputs, kernel_size):
    ks = jax.random.split(key, 6)

    def _weight_norm_fold(v, g):
        # weight_norm(..., dim=None): w = g * v / ||v||_F  (g scalar)
        return g * v / jnp.linalg.norm(v)

    # conv1: Conv1d(n_inputs, n_outputs, K); PyTorch weight shape (Cout, Cin, K)
    v1 = 0.01 * jax.random.normal(ks[0], (n_outputs, n_inputs, kernel_size), jnp.float32)
    w1 = _weight_norm_fold(v1, jnp.float32(0.75))
    b1 = 0.01 * jax.random.normal(ks[1], (n_outputs,), jnp.float32)

    # conv2: Conv1d(n_outputs, n_outputs, K)
    v2 = 0.01 * jax.random.normal(ks[2], (n_outputs, n_outputs, kernel_size), jnp.float32)
    w2 = _weight_norm_fold(v2, jnp.float32(1.25))
    b2 = 0.01 * jax.random.normal(ks[3], (n_outputs,), jnp.float32)

    # downsample: Conv1d(n_inputs, n_outputs, 1)   (n_inputs != n_outputs case)
    wds = 0.01 * jax.random.normal(ks[4], (n_outputs, n_inputs, 1), jnp.float32)
    bds = 0.01 * jax.random.normal(ks[5], (n_outputs,), jnp.float32)

    K, Cin, Cout = kernel_size, n_inputs, n_outputs
    # conv1 im2col: columns ordered (tap t, in-channel ci) to match the kernel's
    # x_taps = concat([tap_0, ..., tap_{K-1}], axis=0)
    w1_mat = jnp.transpose(w1, (0, 2, 1)).reshape(Cout, K * Cin)
    # 1x1 downsample fused into the LAST tap's input block (that tap reads exactly x)
    wds_rows = jnp.zeros((Cout, K * Cin), jnp.float32)
    wds_rows = wds_rows.at[:, (K - 1) * Cin:].set(wds[:, :, 0])
    w1_fused = jnp.concatenate([w1_mat, wds_rows], axis=0)       # (2*Cout, K*Cin)
    b1_fused = jnp.concatenate([b1, bds]).reshape(2 * Cout, 1)

    w2_mat = jnp.transpose(w2, (0, 2, 1)).reshape(Cout, K * Cout)

    kernel_params = {"w1_fused": w1_fused, "b1_fused": b1_fused,
                     "w2_mat": w2_mat, "b2": b2.reshape(Cout, 1)}
    torch_layout = {"w1": w1, "b1": b1, "w2": w2, "b2": b2, "wds": wds, "bds": bds}
    return kernel_params, torch_layout


# ----------------------------------------------------------------------------
# Pure-JAX reference (mirrors the PyTorch ops exactly, NCL layout).
# ----------------------------------------------------------------------------
def reference_forward(x, p, *, kernel_size, dilation, padding):
    def conv1d(x, w, b):
        y = lax.conv_general_dilated(
            x, w, window_strides=(1,), padding=[(padding, padding)],
            rhs_dilation=(dilation,), dimension_numbers=("NCH", "OIH", "NCH"))
        return y + b[None, :, None]

    out = conv1d(x, p["w1"], p["b1"])[:, :, :-padding]     # conv1 + chomp1
    out = jnp.maximum(out, 0.0)                            # relu1 (+ identity dropout)
    out = conv1d(out, p["w2"], p["b2"])[:, :, :-padding]   # conv2 + chomp2
    out = jnp.maximum(out, 0.0)                            # relu2 (+ identity dropout)
    res = lax.conv_general_dilated(                        # 1x1 downsample
        x, p["wds"], window_strides=(1,), padding=[(0, 0)],
        dimension_numbers=("NCH", "OIH", "NCH")) + p["bds"][None, :, None]
    return jnp.maximum(out + res, 0.0)


if __name__ == "__main__":
    key = jax.random.PRNGKey(0)
    kx1, kx2, kp = jax.random.split(key, 3)

    N, n_inputs, n_outputs = 2, 4, 8
    kernel_size, dilation = 3, 2
    padding = (kernel_size - 1) * dilation   # TCN causal padding

    kparams, tparams = make_params(kp, n_inputs, n_outputs, kernel_size)

    # --- test 1: tiny shape (single time tile) --------------------------------
    L1 = 16
    x1 = jax.random.normal(kx1, (N, n_inputs, L1), jnp.float32)
    y1 = jax.block_until_ready(temporal_block_forward(
        x1, kparams, kernel_size=kernel_size, dilation=dilation, padding=padding))
    y1_ref = reference_forward(x1, tparams, kernel_size=kernel_size,
                               dilation=dilation, padding=padding)
    assert y1.shape == (N, n_outputs, L1), y1.shape
    assert jnp.allclose(y1, y1_ref, atol=1e-5, rtol=1e-5), \
        float(jnp.max(jnp.abs(y1 - y1_ref)))

    # --- test 2: multi-tile along L (exercises the cross-tile halo carry) -----
    L2 = 256
    x2 = jax.random.normal(kx2, (N, n_inputs, L2), jnp.float32)
    y2 = jax.block_until_ready(temporal_block_forward(
        x2, kparams, kernel_size=kernel_size, dilation=dilation, padding=padding,
        tile_l=128))
    y2_ref = reference_forward(x2, tparams, kernel_size=kernel_size,
                               dilation=dilation, padding=padding)
    assert y2.shape == (N, n_outputs, L2), y2.shape
    assert jnp.allclose(y2, y2_ref, atol=1e-5, rtol=1e-5), \
        float(jnp.max(jnp.abs(y2 - y2_ref)))

    print("KERNEL_OK")
</pallas_src>

<mosaic_0001>
module attributes {stable_mosaic.version = 11 : i64} {
  func.func @kernel(%arg0: i32, %arg1: i32, %arg2: memref<1x4x16xf32, #tpu.memory_space<vmem>>, %arg3: memref<16x12xf32, #tpu.memory_space<vmem>>, %arg4: memref<16x1xf32, #tpu.memory_space<vmem>>, %arg5: memref<8x24xf32, #tpu.memory_space<vmem>>, %arg6: memref<8x1xf32, #tpu.memory_space<vmem>>, %arg7: memref<1x8x16xf32, #tpu.memory_space<vmem>>, %arg8: memref<4x20xf32, #tpu.memory_space<vmem>>, %arg9: memref<8x20xf32, #tpu.memory_space<vmem>>) attributes {dimension_semantics = [#tpu.dimension_semantics<parallel>, #tpu.dimension_semantics<arbitrary>], iteration_bounds = array<i64: 2, 1>, scalar_prefetch = 0 : i64, scratch_operands = 2 : i64, tpu.core_type = #tpu.core_type<tc>, window_params = [{transform_indices = @transform_0, window_bounds = array<i64: 1, 4, 16>}, {pipeline_mode = #tpu.pipeline_mode<synchronous>, transform_indices = @transform_1, window_bounds = array<i64: 16, 12>}, {pipeline_mode = #tpu.pipeline_mode<synchronous>, transform_indices = @transform_2, window_bounds = array<i64: 16, 1>}, {pipeline_mode = #tpu.pipeline_mode<synchronous>, transform_indices = @transform_3, window_bounds = array<i64: 8, 24>}, {pipeline_mode = #tpu.pipeline_mode<synchronous>, transform_indices = @transform_4, window_bounds = array<i64: 8, 1>}, {transform_indices = @transform_5, window_bounds = array<i64: 1, 8, 16>}]} {
    %c0_i32 = arith.constant 0 : i32
    %0 = arith.cmpi eq, %arg1, %c0_i32 : i32
    %1 = arith.extui %0 : i1 to i32
    %c0_i32_0 = arith.constant 0 : i32
    %2 = arith.cmpi ne, %1, %c0_i32_0 : i32
    scf.if %2 {
      %cst_34 = arith.constant 0.000000e+00 : f32
      %40 = vector.broadcast %cst_34 : f32 to vector<4x4xf32>
      %c0_35 = arith.constant 0 : index
      %c0_36 = arith.constant 0 : index
      %41 = vector.load %arg8[%c0_35, %c0_36] : memref<4x20xf32, #tpu.memory_space<vmem>>, vector<4x4xf32>
      tpu.vector_store %arg8[%c0_35, %c0_36], %40 {strides = array<i32>} : memref<4x20xf32, #tpu.memory_space<vmem>>, vector<4x4xf32>,
      %cst_37 = arith.constant 0.000000e+00 : f32
      %42 = vector.broadcast %cst_37 : f32 to vector<8x4xf32>
      %c0_38 = arith.constant 0 : index
      %c0_39 = arith.constant 0 : index
      %43 = vector.load %arg9[%c0_38, %c0_39] : memref<8x20xf32, #tpu.memory_space<vmem>>, vector<8x4xf32>
      tpu.vector_store %arg9[%c0_38, %c0_39], %42 {strides = array<i32>} : memref<8x20xf32, #tpu.memory_space<vmem>>, vector<8x4xf32>,
    } else {
    }
    %c0_i32_1 = arith.constant 0 : i32
    %3 = arith.cmpi ne, %arg1, %c0_i32_1 : i32
    %4 = arith.extui %3 : i1 to i32
    %c0_i32_2 = arith.constant 0 : i32
    %5 = arith.cmpi ne, %4, %c0_i32_2 : i32
    scf.if %5 {
      %c0_34 = arith.constant 0 : index
      %c16 = arith.constant 16 : index
      %40 = vector.load %arg8[%c0_34, %c16] : memref<4x20xf32, #tpu.memory_space<vmem>>, vector<4x4xf32>
      %c0_35 = arith.constant 0 : index
      %c0_36 = arith.constant 0 : index
      %41 = vector.load %arg8[%c0_35, %c0_36] : memref<4x20xf32, #tpu.memory_space<vmem>>, vector<4x4xf32>
      tpu.vector_store %arg8[%c0_35, %c0_36], %40 {strides = array<i32>} : memref<4x20xf32, #tpu.memory_space<vmem>>, vector<4x4xf32>,
      %c0_37 = arith.constant 0 : index
      %c16_38 = arith.constant 16 : index
      %42 = vector.load %arg9[%c0_37, %c16_38] : memref<8x20xf32, #tpu.memory_space<vmem>>, vector<8x4xf32>
      %c0_39 = arith.constant 0 : index
      %c0_40 = arith.constant 0 : index
      %43 = vector.load %arg9[%c0_39, %c0_40] : memref<8x20xf32, #tpu.memory_space<vmem>>, vector<8x4xf32>
      tpu.vector_store %arg9[%c0_39, %c0_40], %42 {strides = array<i32>} : memref<8x20xf32, #tpu.memory_space<vmem>>, vector<8x4xf32>,
    } else {
    }
    %c0 = arith.constant 0 : index
    %c0_3 = arith.constant 0 : index
    %c0_4 = arith.constant 0 : index
    %6 = vector.load %arg2[%c0, %c0_3, %c0_4] : memref<1x4x16xf32, #tpu.memory_space<vmem>>, vector<1x4x16xf32>
    %7 = vector.shape_cast %6 : vector<1x4x16xf32> to vector<4x16xf32>
    %c0_5 = arith.constant 0 : index
    %c4 = arith.constant 4 : index
    %8 = vector.load %arg8[%c0_5, %c4] : memref<4x20xf32, #tpu.memory_space<vmem>>, vector<4x16xf32>
    tpu.vector_store %arg8[%c0_5, %c4], %7 {strides = array<i32>} : memref<4x20xf32, #tpu.memory_space<vmem>>, vector<4x16xf32>,
    %c0_6 = arith.constant 0 : index
    %c0_7 = arith.constant 0 : index
    %9 = vector.load %arg8[%c0_6, %c0_7] : memref<4x20xf32, #tpu.memory_space<vmem>>, vector<4x16xf32>
    %c0_8 = arith.constant 0 : index
    %c2 = arith.constant 2 : index
    %10 = vector.load %arg8[%c0_8, %c2] : memref<4x20xf32, #tpu.memory_space<vmem>>, vector<4x16xf32>
    %c0_9 = arith.constant 0 : index
    %c4_10 = arith.constant 4 : index
    %11 = vector.load %arg8[%c0_9, %c4_10] : memref<4x20xf32, #tpu.memory_space<vmem>>, vector<4x16xf32>
    %12 = tpu.concatenate %9, %10, %11 in 0 : vector<4x16xf32>, vector<4x16xf32>, vector<4x16xf32> -> vector<12x16xf32>
    %c0_11 = arith.constant 0 : index
    %c0_12 = arith.constant 0 : index
    %13 = vector.load %arg3[%c0_11, %c0_12] : memref<16x12xf32, #tpu.memory_space<vmem>>, vector<16x12xf32>
    %cst = arith.constant dense<0.000000e+00> : vector<16x16xf32>
    %14 = tpu.matmul %13, %12, %cst {dimension_numbers = #tpu.dot_dimension_numbers<[1], [0], [0], [1], [0, 0, 1, 1], [], []>} : vector<16x12xf32>, vector<12x16xf32>, vector<16x16xf32> -> vector<16x16xf32>
    %c0_13 = arith.constant 0 : index
    %c0_14 = arith.constant 0 : index
    %15 = vector.load %arg4[%c0_13, %c0_14] : memref<16x1xf32, #tpu.memory_space<vmem>>, vector<16x1xf32>
    %16 = vector.broadcast %15 : vector<16x1xf32> to vector<16x16xf32>
    %17 = arith.addf %14, %16 : vector<16x16xf32>
    %18 = vector.extract_strided_slice %17 {offsets = [0, 0], sizes = [8, 16], strides = [1, 1]} : vector<16x16xf32> to vector<8x16xf32>
    %cst_15 = arith.constant 0.000000e+00 : f32
    %19 = vector.broadcast %cst_15 : f32 to vector<8x16xf32>
    %20 = arith.maximumf %18, %19 : vector<8x16xf32>
    %21 = vector.extract_strided_slice %17 {offsets = [8, 0], sizes = [8, 16], strides = [1, 1]} : vector<16x16xf32> to vector<8x16xf32>
    %c0_16 = arith.constant 0 : index
    %c4_17 = arith.constant 4 : index
    %22 = vector.load %arg9[%c0_16, %c4_17] : memref<8x20xf32, #tpu.memory_space<vmem>>, vector<8x16xf32>
    tpu.vector_store %arg9[%c0_16, %c4_17], %20 {strides = array<i32>} : memref<8x20xf32, #tpu.memory_space<vmem>>, vector<8x16xf32>,
    %c0_18 = arith.constant 0 : index
    %c0_19 = arith.constant 0 : index
    %23 = vector.load %arg9[%c0_18, %c0_19] : memref<8x20xf32, #tpu.memory_space<vmem>>, vector<8x16xf32>
    %c0_20 = arith.constant 0 : index
    %c2_21 = arith.constant 2 : index
    %24 = vector.load %arg9[%c0_20, %c2_21] : memref<8x20xf32, #tpu.memory_space<vmem>>, vector<8x16xf32>
    %c0_22 = arith.constant 0 : index
    %c4_23 = arith.constant 4 : index
    %25 = vector.load %arg9[%c0_22, %c4_23] : memref<8x20xf32, #tpu.memory_space<vmem>>, vector<8x16xf32>
    %26 = tpu.concatenate %23, %24, %25 in 0 : vector<8x16xf32>, vector<8x16xf32>, vector<8x16xf32> -> vector<24x16xf32>
    %c0_24 = arith.constant 0 : index
    %c0_25 = arith.constant 0 : index
    %27 = vector.load %arg5[%c0_24, %c0_25] : memref<8x24xf32, #tpu.memory_space<vmem>>, vector<8x24xf32>
    %cst_26 = arith.constant dense<0.000000e+00> : vector<8x16xf32>
    %28 = tpu.matmul %27, %26, %cst_26 {dimension_numbers = #tpu.dot_dimension_numbers<[1], [0], [0], [1], [0, 0, 1, 1], [], []>} : vector<8x24xf32>, vector<24x16xf32>, vector<8x16xf32> -> vector<8x16xf32>
    %c0_27 = arith.constant 0 : index
    %c0_28 = arith.constant 0 : index
    %29 = vector.load %arg6[%c0_27, %c0_28] : memref<8x1xf32, #tpu.memory_space<vmem>>, vector<8x1xf32>
    %30 = vector.broadcast %29 : vector<8x1xf32> to vector<8x16xf32>
    %31 = arith.addf %28, %30 : vector<8x16xf32>
    %cst_29 = arith.constant 0.000000e+00 : f32
    %32 = vector.broadcast %cst_29 : f32 to vector<8x16xf32>
    %33 = arith.maximumf %31, %32 : vector<8x16xf32>
    %34 = arith.addf %33, %21 : vector<8x16xf32>
    %cst_30 = arith.constant 0.000000e+00 : f32
    %35 = vector.broadcast %cst_30 : f32 to vector<8x16xf32>
    %36 = arith.maximumf %34, %35 : vector<8x16xf32>
    %c0_31 = arith.constant 0 : index
    %c0_32 = arith.constant 0 : index
    %c0_33 = arith.constant 0 : index
    %37 = vector.load %arg7[%c0_31, %c0_32, %c0_33] : memref<1x8x16xf32, #tpu.memory_space<vmem>>, vector<1x8x16xf32>
    %38 = vector.shape_cast %37 : vector<1x8x16xf32> to vector<8x16xf32>
    %39 = vector.shape_cast %36 : vector<8x16xf32> to vector<1x8x16xf32>
    tpu.vector_store %arg7[%c0_31, %c0_32, %c0_33], %39 {strides = array<i32>} : memref<1x8x16xf32, #tpu.memory_space<vmem>>, vector<1x8x16xf32>,
    return
  }
  func.func @transform_0(%arg0: i32, %arg1: i32) -> (i32, i32, i32) {
    %c0_i32 = arith.constant 0 : i32
    %c0_i32_0 = arith.constant 0 : i32
    return %arg0, %c0_i32, %arg1 : i32, i32, i32
  }
  func.func @transform_1(%arg0: i32, %arg1: i32) -> (i32, i32) {
    %c0_i32 = arith.constant 0 : i32
    %c0_i32_0 = arith.constant 0 : i32
    %c0_i32_1 = arith.constant 0 : i32
    return %c0_i32, %c0_i32_0 : i32, i32
  }
  func.func @transform_2(%arg0: i32, %arg1: i32) -> (i32, i32) {
    %c0_i32 = arith.constant 0 : i32
    %c0_i32_0 = arith.constant 0 : i32
    %c0_i32_1 = arith.constant 0 : i32
    return %c0_i32, %c0_i32_0 : i32, i32
  }
  func.func @transform_3(%arg0: i32, %arg1: i32) -> (i32, i32) {
    %c0_i32 = arith.constant 0 : i32
    %c0_i32_0 = arith.constant 0 : i32
    %c0_i32_1 = arith.constant 0 : i32
    return %c0_i32, %c0_i32_0 : i32, i32
  }
  func.func @transform_4(%arg0: i32, %arg1: i32) -> (i32, i32) {
    %c0_i32 = arith.constant 0 : i32
    %c0_i32_0 = arith.constant 0 : i32
    %c0_i32_1 = arith.constant 0 : i32
    return %c0_i32, %c0_i32_0 : i32, i32
  }
  func.func @transform_5(%arg0: i32, %arg1: i32) -> (i32, i32, i32) {
    %c0_i32 = arith.constant 0 : i32
    %c0_i32_0 = arith.constant 0 : i32
    return %arg0, %c0_i32, %arg1 : i32, i32, i32
  }
}

</mosaic_0001>

<llo_original>
// kernel: tpu_custom_call.1
$region0: #{tpu_custom_call.1}
  #allocation0 [shape = 'u32[]', space=smem, size = 0x4, offset = 0x4, fixed_abs, tag = 'smem constant byte address 0x4 - core index']
  #allocation1 [shape = 'u32[72,128]{1,0:T(1,128)}', space=vmem, size = 0x9000, scoped, tag = 'internal scratch']
  #allocation2 [shape = 'f32[4,20]{1,0:T(4,128)}', space=vmem, size = 0x800, scoped, tag = 'scratch operand']
  #allocation3 [shape = 'f32[8,20]{1,0:T(8,128)}', space=vmem, size = 0x1000, scoped, tag = 'scratch operand']
  %s0 = inlined_call_operand.vmem [shape: f32[2,4,16], index: 0, kind: input, shape index: {}]
  %s1 = inlined_call_operand.vmem [shape: f32[16,12], index: 1, kind: input, shape index: {}]
  %s2 = inlined_call_operand.vmem [shape: f32[16,1], index: 2, kind: input, shape index: {}]
  %s3 = inlined_call_operand.hbm [shape: f32[8,24], index: 3, kind: input, shape index: {}]
  %s4 = inlined_call_operand.vmem [shape: f32[8,1], index: 4, kind: input, shape index: {}]
  %s5 = inlined_call_operand.hbm [shape: f32[2,8,16], index: 5, kind: output, shape index: {}]
  %s6 = sld [smem:[#allocation0]]
  $region65: #{tpu_custom_call.1} parent=0
    _
  %s8 = ssub.s32 1, %s6
  %s9 = scalar_select 0, %s8, %s6
  $region1: #{tpu_custom_call.1} parent=0
    #allocation4 [shape = 'u8[4096]{0}', space=vmem, size = 0x1000, scoped, tag = 'input window, operand 3, single buffered']
    #allocation5 [shape = 's32[2]{0}', space=sflag, size = 0x8, scoped, tag = 'scoped memory for tpu_custom_call.1']
    #allocation6 [shape = 's32[2]{0}', space=sflag, size = 0x8, scoped, tag = 'scoped memory for tpu_custom_call.1']
    #allocation7 [shape = 'u8[8192]{0}', space=vmem, size = 0x2000, scoped, tag = 'output window, operand 0']
    %10 = vsyncpa [#allocation5], 0
    %11 = vsyncpa [#allocation6], 0
    %s12 = scalar_lea.sflag [#allocation6], 1
    %13 = vsyncpa %s12, 0
    loop: start=0, step=1, limit=4
    $region2: #{tpu_custom_call.1} parent=1 // loop_pre_header
      _
    $region3: #{tpu_custom_call.1} parent=1 // loop_header
      %s15 = sphi 0, %s19
      %p16 = scmp.ge.s32.totalorder %s15, 4
      %s22 = sphi 0, %s34
      %s23 = sphi 0, %s30
      %s24 = sphi 0, %s22
      %s25 = sphi 0, %s23
      %s26 = sphi 0, %s24
      %s27 = sphi 0, %s25
      %s39 = sphi 0, %s41
      %s42 = sphi 0, %s39
      %s43 = sphi 0, %s42
      %s59 = sphi 0, %s43
      %s63 = sphi 0, %s63
      %s65 = sphi 0, %s63
      %s66 = sphi 0, %s65
      %s80 = sphi 0, %s66
      %s84 = sphi 0, %s84
      %s86 = sphi 0, %s84
      %s87 = sphi 0, %s86
      %s101 = sphi 0, %s87
      %s105 = sphi 0, %s105
      %s107 = sphi 0, %s105
      %s108 = sphi 0, %s107
      %s122 = sphi 0, %s108
      %s126 = sphi 0, %s126
      %s128 = sphi 0, %s126
      %s129 = sphi 0, %s128
      %s143 = sphi 0, %s129
      %s151 = sphi 0, %s153
      %s154 = sphi 0, %s151
      %s155 = sphi 0, %s154
      %s171 = sphi 0, %s155
    $region4: #{tpu_custom_call.1} parent=1 // loop_header_branch
      %18 = sbr.rel (%p16) target = $region8
    $region5: #{tpu_custom_call.1} parent=1 // loop_body
      %s20 = ssub.s32 %s15, 1
      %s21 = ssub.s32 %s15, 2
      %s28 = sadd.s32 1, %s23
      %p29 = scmp.ge.s32.totalorder %s28, 1
      %s30 = scalar_select %p29, 0, %s28
      %s31 = sadd.s32 1, %s22
      %s32 = scalar_select %p29, %s31, %s22
      %p33 = scmp.ge.s32.totalorder %s32, 2
      %s34 = scalar_select %p33, 0, %s32
      %s35 = ssub.s32 %s22, %s34
      %s36 = ssub.s32 %s23, %s30
      %s37 = sor.u32 %s35, %s36
      %p38 = scmp.eq.s32.totalorder %s37, 0
      %s40 = sadd.s32 %s39, 1
      %s41 = scalar_select %p38, %s39, %s40
      %p44 = pneg %p38
      %p45 = scmp.eq.s32.totalorder %s15, 1
      %p46 = por %p44, %p45
      %p47 = scmp.ne.s32.totalorder %s39, %s42
      %p48 = scmp.eq.s32.totalorder %s15, 0
      %p49 = por %p47, %p48
      %p50 = scmp.ne.s32.totalorder %s39, %s42
      %p51 = scmp.eq.s32.totalorder %s20, 1
      %p52 = por %p50, %p51
      %p53 = scmp.ne.s32.totalorder %s42, %s43
      %p54 = scmp.eq.s32.totalorder %s20, 0
      %p55 = por %p53, %p54
      %p56 = scmp.ne.s32.totalorder %s42, %s43
      %p57 = scmp.eq.s32.totalorder %s21, 1
      %p58 = por %p56, %p57
      %p60 = scmp.ne.s32.totalorder %s43, %s59
      %p61 = scmp.eq.s32.totalorder %s21, 0
      %p62 = por %p60, %p61
      %s64 = sadd.s32 %s63, 1
      %p67 = scmp.eq.s32.totalorder %s15, 1
      %p68 = scmp.ne.s32.totalorder %s63, %s65
      %p69 = scmp.eq.s32.totalorder %s15, 0
      %p70 = por %p68, %p69
      %p71 = scmp.ne.s32.totalorder %s63, %s65
      %p72 = scmp.eq.s32.totalorder %s20, 1
      %p73 = por %p71, %p72
      %p74 = scmp.ne.s32.totalorder %s65, %s66
      %p75 = scmp.eq.s32.totalorder %s20, 0
      %p76 = por %p74, %p75
      %p77 = scmp.ne.s32.totalorder %s65, %s66
      %p78 = scmp.eq.s32.totalorder %s21, 1
      %p79 = por %p77, %p78
      %p81 = scmp.ne.s32.totalorder %s66, %s80
      %p82 = scmp.eq.s32.totalorder %s21, 0
      %p83 = por %p81, %p82
      %s85 = sadd.s32 %s84, 1
      %p88 = scmp.eq.s32.totalorder %s15, 1
      %p89 = scmp.ne.s32.totalorder %s84, %s86
      %p90 = scmp.eq.s32.totalorder %s15, 0
      %p91 = por %p89, %p90
      %p92 = scmp.ne.s32.totalorder %s84, %s86
      %p93 = scmp.eq.s32.totalorder %s20, 1
      %p94 = por %p92, %p93
      %p95 = scmp.ne.s32.totalorder %s86, %s87
      %p96 = scmp.eq.s32.totalorder %s20, 0
      %p97 = por %p95, %p96
      %p98 = scmp.ne.s32.totalorder %s86, %s87
      %p99 = scmp.eq.s32.totalorder %s21, 1
      %p100 = por %p98, %p99
      %p102 = scmp.ne.s32.totalorder %s87, %s101
      %p103 = scmp.eq.s32.totalorder %s21, 0
      %p104 = por %p102, %p103
      %s106 = sadd.s32 %s105, 1
      %p109 = scmp.eq.s32.totalorder %s15, 1
      %p110 = scmp.ne.s32.totalorder %s105, %s107
      %p111 = scmp.eq.s32.totalorder %s15, 0
      %p112 = por %p110, %p111
      %p113 = scmp.ne.s32.totalorder %s105, %s107
      %p114 = scmp.eq.s32.totalorder %s20, 1
      %p115 = por %p113, %p114
      %p116 = scmp.ne.s32.totalorder %s107, %s108
      %p117 = scmp.eq.s32.totalorder %s20, 0
      %p118 = por %p116, %p117
      %p119 = scmp.ne.s32.totalorder %s107, %s108
      %p120 = scmp.eq.s32.totalorder %s21, 1
      %p121 = por %p119, %p120
      %p123 = scmp.ne.s32.totalorder %s108, %s122
      %p124 = scmp.eq.s32.totalorder %s21, 0
      %p125 = por %p123, %p124
      %s127 = sadd.s32 %s126, 1
      %p130 = scmp.eq.s32.totalorder %s15, 1
      %p131 = scmp.ne.s32.totalorder %s126, %s128
      %p132 = scmp.eq.s32.totalorder %s15, 0
      %p133 = por %p131, %p132
      %p134 = scmp.ne.s32.totalorder %s126, %s128
      %p135 = scmp.eq.s32.totalorder %s20, 1
      %p136 = por %p134, %p135
      %p137 = scmp.ne.s32.totalorder %s128, %s129
      %p138 = scmp.eq.s32.totalorder %s20, 0
      %p139 = por %p137, %p138
      %p140 = scmp.ne.s32.totalorder %s128, %s129
      %p141 = scmp.eq.s32.totalorder %s21, 1
      %p142 = por %p140, %p141
      %p144 = scmp.ne.s32.totalorder %s129, %s143
      %p145 = scmp.eq.s32.totalorder %s21, 0
      %p146 = por %p144, %p145
      %s147 = ssub.s32 %s22, %s34
      %s148 = ssub.s32 %s23, %s30
      %s149 = sor.u32 %s147, %s148
      %p150 = scmp.eq.s32.totalorder %s149, 0
      %s152 = sadd.s32 %s151, 1
      %s153 = scalar_select %p150, %s151, %s152
      %p156 = pneg %p150
      %p157 = scmp.eq.s32.totalorder %s15, 1
      %p158 = por %p156, %p157
      %p159 = scmp.ne.s32.totalorder %s151, %s154
      %p160 = scmp.eq.s32.totalorder %s15, 0
      %p161 = por %p159, %p160
      %p162 = scmp.ne.s32.totalorder %s151, %s154
      %p163 = scmp.eq.s32.totalorder %s20, 1
      %p164 = por %p162, %p163
      %p165 = scmp.ne.s32.totalorder %s154, %s155
      %p166 = scmp.eq.s32.totalorder %s20, 0
      %p167 = por %p165, %p166
      %p168 = scmp.ne.s32.totalorder %s154, %s155
      %p169 = scmp.eq.s32.totalorder %s21, 1
      %p170 = por %p168, %p169
      %p172 = scmp.ne.s32.totalorder %s155, %s171
      %p173 = scmp.eq.s32.totalorder %s21, 0
      %p174 = por %p172, %p173
      %p175 = scmp.le.s32.totalorder 1, %s15
      %p176 = scmp.lt.s32.totalorder %s15, 3
      %p177 = pnand %p175, %p176
      %p178 = pneg %p177
      // Predicated region
      $region9: #{tpu_custom_call.1} parent=5 // pred_check
        _
      $region10: #{tpu_custom_call.1} parent=5 // pred_check_branch
        %180 = sbr.rel (%p177) target = $region12
      $region11: #{tpu_custom_call.1} parent=5 // pred_region
        %s181 = ssub.s32 %s15, 1
        // Predicated region
        $region13: #{tpu_custom_call.1} parent=11 // pred_check
          %p182 = pneg %p76
        $region14: #{tpu_custom_call.1} parent=11 // pred_check_branch
          %184 = sbr.rel (%p182) target = $region16
        $region15: #{tpu_custom_call.1} parent=11 // pred_region
          _
        $region16: #{tpu_custom_call.1} parent=11 // pred_fallthru
          _
        // Predicated region
        $region17: #{tpu_custom_call.1} parent=11 // pred_check
          %p185 = pneg %p97
        $region18: #{tpu_custom_call.1} parent=11 // pred_check_branch
          %187 = sbr.rel (%p185) target = $region20
        $region19: #{tpu_custom_call.1} parent=11 // pred_region
          _
        $region20: #{tpu_custom_call.1} parent=11 // pred_fallthru
          _
        // Predicated region
        $region21: #{tpu_custom_call.1} parent=11 // pred_check
          %p188 = pneg %p118
        $region22: #{tpu_custom_call.1} parent=11 // pred_check_branch
          %190 = sbr.rel (%p188) target = $region24
        $region23: #{tpu_custom_call.1} parent=11 // pred_region
          %192 = vsyncadd [#allocation5], 0
          %s194 = sshll.u32 %s3, 4
          %s195 = int_to_ptr.hbm [resolvable:$true] %s194
          %s196 = sshll.u32 [#allocation4], 4
          %s197 = int_to_ptr.vmem [resolvable:$true] %s196
          %199 = dma.hbm_to_vmem [thread:$0]  %s195, 128, %s197, [#allocation5]
        $region24: #{tpu_custom_call.1} parent=11 // pred_fallthru
          _
        // Predicated region
        $region25: #{tpu_custom_call.1} parent=11 // pred_check
          %p200 = pneg %p139
        $region26: #{tpu_custom_call.1} parent=11 // pred_check_branch
          %202 = sbr.rel (%p200) target = $region28
        $region27: #{tpu_custom_call.1} parent=11 // pred_region
          _
        $region28: #{tpu_custom_call.1} parent=11 // pred_fallthru
          _
      $region12: #{tpu_custom_call.1} parent=5 // pred_fallthru
        _
      %p203 = scmp.lt.s32.totalorder %s15, 2
      // Predicated region
      $region29: #{tpu_custom_call.1} parent=5 // pred_check
        %p204 = pneg %p203
      $region30: #{tpu_custom_call.1} parent=5 // pred_check_branch
        %206 = sbr.rel (%p204) target = $region32
      $region31: #{tpu_custom_call.1} parent=5 // pred_region
        // Predicated region
        $region33: #{tpu_custom_call.1} parent=31 // pred_check
          %p207 = pneg %p49
        $region34: #{tpu_custom_call.1} parent=31 // pred_check_branch
          %209 = sbr.rel (%p207) target = $region36
        $region35: #{tpu_custom_call.1} parent=31 // pred_region
          %p210 = scmp.lt.s32.totalorder %s22, 1
          %s211 = scalar_select %p210, %s22, 1
          %p212 = scmp.lt.s32.totalorder %s23, 0
          %s213 = scalar_select %p212, %s23, 0
          %s214 = sadd.s32 %s213, %s211
          %s215 = smul.addr %s214, 4
          %s216 = scalar_lea.vmem %s0, %s215
        $region36: #{tpu_custom_call.1} parent=31 // pred_fallthru
          _
      $region32: #{tpu_custom_call.1} parent=5 // pred_fallthru
        _
      %p217 = scmp.le.s32.totalorder 1, %s15
      %p218 = scmp.lt.s32.totalorder %s15, 3
      %p219 = pnand %p217, %p218
      %p220 = pneg %p219
      // Predicated region
      $region37: #{tpu_custom_call.1} parent=5 // pred_check
        _
      $region38: #{tpu_custom_call.1} parent=5 // pred_check_branch
        %222 = sbr.rel (%p219) target = $region40
      $region39: #{tpu_custom_call.1} parent=5 // pred_region
        %s223 = ssub.s32 %s15, 1
        // Predicated region
        $region41: #{tpu_custom_call.1} parent=39 // pred_check
          %p224 = pneg %p118
        $region42: #{tpu_custom_call.1} parent=39 // pred_check_branch
          %226 = sbr.rel (%p224) target = $region44
        $region43: #{tpu_custom_call.1} parent=39 // pred_region
          %228 = dma.done [#allocation5], 128
        $region44: #{tpu_custom_call.1} parent=39 // pred_fallthru
          _
        %p229 = scmp.lt.s32.totalorder %s24, 1
        %s230 = scalar_select %p229, %s24, 1
        %p231 = scmp.lt.s32.totalorder %s25, 0
        %s232 = scalar_select %p231, %s25, 0
        %s233 = sadd.s32 %s232, %s230
        %s234 = smul.addr %s233, 4
        %s235 = scalar_lea.vmem %s0, %s234
        %p236 = pneg %p55
        %p237 = pneg %p52
        %p238 = pneg %p76
        %p239 = pneg %p73
        %p240 = pneg %p97
        %p241 = pneg %p94
        %p242 = pneg %p118
        %p243 = pneg %p115
        %p244 = pneg %p139
        %p245 = pneg %p136
        %p246 = pneg %p167
        %p247 = pneg %p164
        %s248 = sand.u32 %s154, 1
        %s249 = scalar_lea.sflag [#allocation6], %s248
        %s250 = sand.u32 %s154, 1
        %s251 = smul.addr %s250, 8
        %s252 = scalar_lea.vmem [#allocation7], %s251
        %p253 = scmp.lt.s32.totalorder %s24, 1
        %s254 = scalar_select %p253, %s24, 1
        %p255 = scmp.lt.s32.totalorder %s25, 0
        %s256 = scalar_select %p255, %s25, 0
        %s257 = sadd.s32 %s256, %s254
        %s258 = smul.addr %s257, 4
        %s259 = scalar_lea.vmem %s0, %s258
        %p260 = scmp.eq.s32.totalorder %s25, 0
        // Predicated region
        $region45: #{tpu_custom_call.1} parent=39 // pred_check
          %p261 = pneg %p260
        $region46: #{tpu_custom_call.1} parent=39 // pred_check_branch
          %263 = sbr.rel (%p261) target = $region48
        $region47: #{tpu_custom_call.1} parent=39 // pred_region
          %vm264 = vcmask 27648
          %265 = vst.msk [vmem:[#allocation2] sm:$0xf] %vm264, 0.0
          %vm266 = vcmask 31744
          %267 = vst.msk [vmem:[#allocation3] sm:$0xff] %vm266, 0.0
        $region48: #{tpu_custom_call.1} parent=39 // pred_fallthru
          _
        %p268 = scmp.ne.s32.totalorder %s25, 0
        // Predicated region
        $region49: #{tpu_custom_call.1} parent=39 // pred_check
          %p269 = pneg %p268
        $region50: #{tpu_custom_call.1} parent=39 // pred_check_branch
          %271 = sbr.rel (%p269) target = $region52
        $region51: #{tpu_custom_call.1} parent=39 // pred_region
          %v272 = vld [vmem:[#allocation2] sm:$0xf]
          %274 = vrot.lane.b32.xlu0 %v272, 112
          %v275 = vpop.permute.xlu0 %274
          %vm277 = vcmask 27648
          %278 = vst.msk [vmem:[#allocation2] sm:$0xf] %vm277, %v275
          %v279 = vld [vmem:[#allocation3] sm:$0xff]
          %281 = vrot.lane.b32.xlu0 %v279, 112
          %v282 = vpop.permute.xlu0 %281
          %vm284 = vcmask 31744
          %285 = vst.msk [vmem:[#allocation3] sm:$0xff] %vm284, %v282
        $region52: #{tpu_custom_call.1} parent=39 // pred_fallthru
          _
        %v286 = vld [vmem:[%s259] sm:$0xf]
        %288 = vrot.lane.b32.xlu0 %v286, 4
        %v289 = vpop.permute.xlu0 %288
        %vm291 = vcmask 158752
        %292 = vst.msk [vmem:[#allocation2] sm:$0xf] %vm291, %v289
        %v293 = vld [vmem:[#allocation2] sm:$0xf]
        %v295 = vrot.slane %v293, 4
        %296 = vrot.lane.b32.xlu0 %v295, 126
        %v297 = vpop.permute.xlu0 %296
        %299 = vrot.lane.b32.xlu0 %v293, 124
        %v300 = vpop.permute.xlu0 %299
        %vm301 = vcmask 1043456
        %v302 = vsel %vm301, %v293, %v297
        %v303 = vld [vmem:[%s1] sm:$0xff]
        %v304 = vld [vmem:[%s1 + $0x8] sm:$0xff]
        %v305 = vld [vmem:[%s2] sm:$0xff]
        %v306 = vld [vmem:[%s2 + $0x8] sm:$0xff]
        %308 = vset.pattern.permute.xlu0 0
        %309 = vperm.xlu0 %308, %v305
        %v310 = vpop.permute.xlu0 %309
        %313 = vset.pattern.permute.xlu0 0
        %314 = vperm.xlu0 %313, %v306
        %v315 = vpop.permute.xlu0 %314
        %vm317 = vcmask 97280
        %v319 = vsel %vm317, %v303, 0
        %v322 = vsel %vm317, %v304, 0
        %v324 = vsel %vm301, %v300, 0
        %326 = vmatpush.msra.mxu0 0.0
        %327 = vmatpush.msra.mxu0 0.0
        %328 = vmatpush.msra.mxu0 0.0
        %329 = vmatpush.msra.mxu0 0.0
        %330 = vmatpush.msra.mxu0 0.0
        %331 = vmatpush.msra.mxu0 0.0
        %332 = vmatpush.msra.mxu0 0.0
        %333 = vmatpush.msra.mxu0 0.0
        %334 = vmatpush.msra.mxu0 0.0
        %335 = vmatpush.msra.mxu0 0.0
        %336 = vmatpush.msra.mxu0 0.0
        %337 = vmatpush.msra.mxu0 0.0
        %338 = vmatpush.msra.mxu0 0.0
        %339 = vmatpush.msra.mxu0 0.0
        %340 = vmatpush.msra.mxu0 %v324
        %341 = vmatpush.msra.mxu0 %v302
        %342 = vmatmul.f32.gmra.mxu0 %v319
        %v343 = vpop.f32.mrf.mxu0
        %v344 = vadd.f32 %v310, %v343
        %345 = vmatmul.f32.gmra.mxu0 %v322
        %v346 = vpop.f32.mrf.mxu0
        %v347 = vadd.f32 %v315, %v346
        %348 = vdwg.mxu0
        %v349 = vmax.f32 %v344, 0.0
        %351 = vrot.lane.b32.xlu0 %v349, 4
        %v352 = vpop.permute.xlu0 %351
        %vm354 = vcmask 162848
        %355 = vst.msk [vmem:[#allocation3] sm:$0xff] %vm354, %v352
        %v356 = vld [vmem:[#allocation3] sm:$0xff]
        %358 = vrot.lane.b32.xlu0 %v356, 126
        %v359 = vpop.permute.xlu0 %358
        %361 = vrot.lane.b32.xlu0 %v356, 124
        %v362 = vpop.permute.xlu0 %361
        %v364 = vld [vmem:[#allocation4] sm:$0xff]
        %v365 = vld [vmem:[%s4] sm:$0xff]
        %367 = vset.pattern.permute.xlu0 0
        %368 = vperm.xlu0 %367, %v365
        %v369 = vpop.permute.xlu0 %368
        %vm371 = vcmask 195584
        %v373 = vsel %vm371, %v364, 0
        %375 = vmatpush.msra.mxu0 0.0
        %376 = vmatpush.msra.mxu0 0.0
        %377 = vmatpush.msra.mxu0 0.0
        %378 = vmatpush.msra.mxu0 0.0
        %379 = vmatpush.msra.mxu0 0.0
        %380 = vmatpush.msra.mxu0 0.0
        %381 = vmatpush.msra.mxu0 0.0
        %382 = vmatpush.msra.mxu0 0.0
        %383 = vmatpush.msra.mxu0 0.0
        %384 = vmatpush.msra.mxu0 0.0
        %385 = vmatpush.msra.mxu0 0.0
        %386 = vmatpush.msra.mxu0 0.0
        %387 = vmatpush.msra.mxu0 0.0
        %388 = vmatpush.msra.mxu0 %v362
        %389 = vmatpush.msra.mxu0 %v359
        %390 = vmatpush.msra.mxu0 %v356
        %391 = vmatmul.f32.gmra.mxu0 %v373
        %v392 = vpop.f32.mrf.mxu0
        %v393 = vadd.f32 %v369, %v392
        %394 = vdwg.mxu0
        %v395 = vmax.f32 %v393, 0.0
        %v396 = vadd.f32 %v395, %v347
        %v397 = vmax.f32 %v396, 0.0
        %vm398 = vcmask 130048
        %399 = vst.msk [vmem:[%s252] sm:$0xff] %vm398, %v397
        %s400 = sand.u32 %s154, 1
        %s401 = scalar_lea.sflag [#allocation6], %s400
        %s402 = sand.u32 %s154, 1
        %s403 = smul.addr %s402, 8
        %s404 = scalar_lea.vmem [#allocation7], %s403
        // Predicated region
        $region53: #{tpu_custom_call.1} parent=39 // pred_check
          %p405 = pneg %p164
        $region54: #{tpu_custom_call.1} parent=39 // pred_check_branch
          %407 = sbr.rel (%p405) target = $region56
        $region55: #{tpu_custom_call.1} parent=39 // pred_region
          %409 = vsyncadd %s401, 0
          %s410 = sadd.s32 %s25, %s24
          %s411 = smul.addr %s410, 8
          %s412 = scalar_lea.hbm %s5, %s411
          %s414 = sshll.u32 %s404, 4
          %s415 = int_to_ptr.vmem [resolvable:$true] %s414
          %s416 = sshll.u32 %s412, 4
          %s417 = int_to_ptr.hbm [resolvable:$true] %s416
          %419 = dma.vmem_to_hbm [thread:$0]  %s415, 128, %s417, %s401
        $region56: #{tpu_custom_call.1} parent=39 // pred_fallthru
          _
      $region40: #{tpu_custom_call.1} parent=5 // pred_fallthru
        _
      %p420 = scmp.le.s32.totalorder 2, %s15
      // Predicated region
      $region57: #{tpu_custom_call.1} parent=5 // pred_check
        %p421 = pneg %p420
      $region58: #{tpu_custom_call.1} parent=5 // pred_check_branch
        %423 = sbr.rel (%p421) target = $region60
      $region59: #{tpu_custom_call.1} parent=5 // pred_region
        %s424 = ssub.s32 %s15, 2
        // Predicated region
        $region61: #{tpu_custom_call.1} parent=59 // pred_check
          %p425 = pneg %p170
        $region62: #{tpu_custom_call.1} parent=59 // pred_check_branch
          %427 = sbr.rel (%p425) target = $region64
        $region63: #{tpu_custom_call.1} parent=59 // pred_region
          %s428 = sand.u32 %s155, 1
          %s429 = scalar_lea.sflag [#allocation6], %s428
          %s430 = sand.u32 %s155, 1
          %s431 = smul.addr %s430, 8
          %s432 = scalar_lea.vmem [#allocation7], %s431
          %434 = dma.done %s429, 128
        $region64: #{tpu_custom_call.1} parent=59 // pred_fallthru
          _
      $region60: #{tpu_custom_call.1} parent=5 // pred_fallthru
        _
    $region6: #{tpu_custom_call.1} parent=1 // loop_footer
      %s19 = sadd.s32 1, %s15
    $region7: #{tpu_custom_call.1} parent=1 // loop_footer_branch
      %14 = sbr.rel target = $region3
    $region8: #{tpu_custom_call.1} parent=1 // loop_exit
      _
    %435 = vsyncpa [#allocation5], 1
    %s436 = scalar_lea.sflag [#allocation5], 1
    %437 = vsyncpa %s436, 1
    %438 = vsyncpa [#allocation6], 1
    %s439 = scalar_lea.sflag [#allocation6], 1
    %440 = vsyncpa %s439, 1

</llo_original>
